<compile_context>
chip_gen: v5e
topology: v5e:2x2
jax: 0.10.0
libtpu: 0.0.40
codegen_flags: <defaults>
</compile_context>

<pallas_src>
import functools

import jax
import jax.numpy as jnp
from jax.experimental import pallas as pl
from jax.experimental.pallas import tpu as pltpu


def _round_up(x, m):
    return ((x + m - 1) // m) * m


def _vmem_capacity_bytes():
    """Physical VMEM of the local TPU (128 MiB v5e/v6e, 64 MiB per-TC v7x)."""
    try:
        cap = getattr(pltpu.get_tpu_info(), "vmem_capacity_bytes", None)
        if cap:
            return int(cap)
    except Exception:
        pass
    return 64 * 1024 * 1024  # conservative default (v7x-sized)


def ae_fwd_kernel(x_ref, we_ref, be_ref, wd_ref, bd_ref, out_ref):
    # x_ref:  [TB, D]      input tile (caller dtype, typically f32)
    # we_ref: [D, LATENT]  bf16 encoder weight, be_ref: [1, LATENT] f32 bias
    # wd_ref: [LATENT, D]  bf16 decoder weight, bd_ref: [1, D]      f32 bias
    # out_ref:[TB, D]      bf16 reconstruction tile
    x = x_ref[...]

    # torch.nan_to_num defaults, applied in the *input* dtype (before any
    # bf16 downcast): nan -> 0, +inf -> finfo.max, -inf -> finfo.min.
    finfo = jnp.finfo(x.dtype)
    x = jnp.where(jnp.isnan(x), jnp.zeros_like(x), x)   # NaN -> 0
    x = jnp.clip(x, finfo.min, finfo.max)               # +/-inf -> finfo max/min

    # Encoder: bf16 operands, f32 MXU accumulation, f32 bias add.
    z = jnp.dot(x.astype(jnp.bfloat16), we_ref[...],
                preferred_element_type=jnp.float32) + be_ref[...]

    # Decoder: bf16 operands, f32 MXU accumulation, f32 bias add.
    r = jnp.dot(z.astype(jnp.bfloat16), wd_ref[...],
                preferred_element_type=jnp.float32) + bd_ref[...]

    out_ref[...] = r.astype(out_ref.dtype)


@functools.partial(jax.jit, static_argnames=("out_dtype",))
def base_ae_forward(x_nchw, w_enc, b_enc, w_dec, b_dec, *, out_dtype=jnp.bfloat16):
    """BaseAE.forward: decode(encode(nan_to_num(x))).  Returns NCHW recon.

    out_dtype defaults to bf16 (halves the output HBM stream; the matmuls are
    bf16 anyway).  Pass jnp.float32 for full-precision output if required.
    """
    B, C, H, W = x_nchw.shape
    D = C * H * W
    LATENT = w_enc.shape[1]

    # Free reshape only — no dtype cast and no pad in the wrapper (both would
    # be full extra HBM passes for a memory-bound kernel).
    x_flat = x_nchw.reshape(B, D)
    x_bytes = x_flat.dtype.itemsize
    out_bytes = jnp.dtype(out_dtype).itemsize

    we = w_enc.astype(jnp.bfloat16)
    wd = w_dec.astype(jnp.bfloat16)
    be = b_enc.astype(jnp.float32).reshape(1, LATENT)
    bd = b_dec.astype(jnp.float32).reshape(1, D)

    # --- Batch-tile sizing: D-, dtype- and generation-aware -------------------
    # Resident params (single-buffered via pl.Buffered(1)).
    weight_bytes = 2 * (D * LATENT + LATENT * D) + 4 * (LATENT + D)
    vmem_phys = _vmem_capacity_bytes()
    slack = 4 << 20                                   # Mosaic internal scratch
    per_row_io = 2 * D * (x_bytes + out_bytes)        # double-buffered x + out, per row
    io_budget = max(int(0.70 * vmem_phys) - weight_bytes - slack, 8 * per_row_io)
    tb_max = max(8, (io_budget // per_row_io) // 8 * 8)
    # Keep >= 2 grid steps so both v7x TensorCores get work (cheap on v5e/v6e).
    tb_two_step = max(8, _round_up(pl.cdiv(B, 2), 8))
    tb = max(8, min(tb_max, _round_up(B, 8), tb_two_step))
    grid = pl.cdiv(B, tb)                             # ragged edge handled by Pallas

    vmem_usage = 2 * tb * D * (x_bytes + out_bytes) + weight_bytes
    vmem_limit = max(32 << 20,                        # v5e default is only 16 MiB
                     min(int(0.92 * vmem_phys), vmem_usage + (8 << 20)))

    cost = pl.CostEstimate(
        flops=4 * B * D * LATENT,                     # two B x D x LATENT matmuls
        transcendentals=0,
        bytes_accessed=(B * D * (x_bytes + out_bytes) # x in + out
                        + 2 * D * LATENT * 2          # bf16 weights
                        + (D + LATENT) * 4),          # f32 biases
    )

    resident = dict(pipeline_mode=pl.Buffered(1))     # constant blocks: 1 buffer

    out_flat = pl.pallas_call(
        ae_fwd_kernel,
        out_shape=jax.ShapeDtypeStruct((B, D), out_dtype),
        grid=(grid,),
        in_specs=[
            pl.BlockSpec((tb, D), lambda i: (i, 0)),                  # x tile
            pl.BlockSpec((D, LATENT), lambda i: (0, 0), **resident),  # enc weight
            pl.BlockSpec((1, LATENT), lambda i: (0, 0), **resident),  # enc bias
            pl.BlockSpec((LATENT, D), lambda i: (0, 0), **resident),  # dec weight
            pl.BlockSpec((1, D), lambda i: (0, 0), **resident),       # dec bias
        ],
        out_specs=pl.BlockSpec((tb, D), lambda i: (i, 0)),
        compiler_params=pltpu.CompilerParams(
            dimension_semantics=("parallel",),
            vmem_limit_bytes=vmem_limit,
        ),
        cost_estimate=cost,
    )(x_flat, we, be, wd, bd)

    return out_flat.reshape(B, C, H, W)


def base_ae_forward_ref(x_nchw, w_enc, b_enc, w_dec, b_dec, out_dtype=jnp.bfloat16):
    """Pure-JAX reference with identical numerics (bf16 operands, f32 accum)."""
    B, C, H, W = x_nchw.shape
    D = C * H * W
    x = jnp.nan_to_num(x_nchw.reshape(B, D))
    z = jnp.dot(x.astype(jnp.bfloat16), w_enc.astype(jnp.bfloat16),
                preferred_element_type=jnp.float32) + b_enc.astype(jnp.float32)
    r = jnp.dot(z.astype(jnp.bfloat16), w_dec.astype(jnp.bfloat16),
                preferred_element_type=jnp.float32) + b_dec.astype(jnp.float32)
    return r.astype(out_dtype).reshape(B, C, H, W)


if __name__ == "__main__":
    # Small shapes consistent with an image AE: batch=2, channels=4, spatial=16.
    B, C, H, W = 2, 4, 16, 16
    D = C * H * W            # 1024
    LATENT = 32

    key = jax.random.PRNGKey(0)
    k_x, k_we, k_be, k_wd, k_bd, k_nan = jax.random.split(key, 6)

    x = jax.random.normal(k_x, (B, C, H, W), dtype=jnp.float32)
    # Inject some NaNs so the nan_to_num path is exercised.
    nan_mask = jax.random.bernoulli(k_nan, p=0.05, shape=(B, C, H, W))
    x = jnp.where(nan_mask, jnp.nan, x)

    # Deterministic parameter init (Linear-style scaled normals).
    w_enc = jax.random.normal(k_we, (D, LATENT), dtype=jnp.float32) * (1.0 / jnp.sqrt(D))
    b_enc = jax.random.normal(k_be, (LATENT,), dtype=jnp.float32) * 0.01
    w_dec = jax.random.normal(k_wd, (LATENT, D), dtype=jnp.float32) * (1.0 / jnp.sqrt(LATENT))
    b_dec = jax.random.normal(k_bd, (D,), dtype=jnp.float32) * 0.01

    out = base_ae_forward(x, w_enc, b_enc, w_dec, b_dec)
    out = jax.block_until_ready(out)

    ref = base_ae_forward_ref(x, w_enc, b_enc, w_dec, b_dec)
    assert out.shape == (B, C, H, W), out.shape
    assert jnp.all(jnp.isfinite(out.astype(jnp.float32))), "non-finite values in reconstruction"
    assert jnp.allclose(out.astype(jnp.float32), ref.astype(jnp.float32),
                        atol=2e-2, rtol=2e-2), "mismatch vs JAX reference"

    print("KERNEL_OK")
</pallas_src>

<mosaic_0001>
module attributes {stable_mosaic.version = 11 : i64} {
  func.func @ae_fwd_kernel(%arg0: i32, %arg1: memref<8x1024xf32, #tpu.memory_space<vmem>>, %arg2: memref<1024x32xbf16, #tpu.memory_space<vmem>>, %arg3: memref<1x32xf32, #tpu.memory_space<vmem>>, %arg4: memref<32x1024xbf16, #tpu.memory_space<vmem>>, %arg5: memref<1x1024xf32, #tpu.memory_space<vmem>>, %arg6: memref<8x1024xbf16, #tpu.memory_space<vmem>>) attributes {dimension_semantics = [#tpu.dimension_semantics<parallel>], iteration_bounds = array<i64: 1>, scalar_prefetch = 0 : i64, scratch_operands = 0 : i64, tpu.core_type = #tpu.core_type<tc>, window_params = [{transform_indices = @transform_0, window_bounds = array<i64: 8, 1024>}, {pipeline_mode = #tpu.pipeline_mode<synchronous>, transform_indices = @transform_1, window_bounds = array<i64: 1024, 32>}, {pipeline_mode = #tpu.pipeline_mode<synchronous>, transform_indices = @transform_2, window_bounds = array<i64: 1, 32>}, {pipeline_mode = #tpu.pipeline_mode<synchronous>, transform_indices = @transform_3, window_bounds = array<i64: 32, 1024>}, {pipeline_mode = #tpu.pipeline_mode<synchronous>, transform_indices = @transform_4, window_bounds = array<i64: 1, 1024>}, {transform_indices = @transform_5, window_bounds = array<i64: 8, 1024>}]} {
    %c0 = arith.constant 0 : index
    %c0_0 = arith.constant 0 : index
    %0 = vector.load %arg1[%c0, %c0_0] : memref<8x1024xf32, #tpu.memory_space<vmem>>, vector<8x1024xf32>
    %1 = arith.cmpf one, %0, %0 : vector<8x1024xf32>
    %cst = arith.constant 0.000000e+00 : f32
    %2 = vector.broadcast %cst : f32 to vector<8x1024xf32>
    %3 = arith.select %1, %2, %0 : vector<8x1024xi1>, vector<8x1024xf32>
    %cst_1 = arith.constant -3.40282347E+38 : f32
    %cst_2 = arith.constant 3.40282347E+38 : f32
    %4 = vector.broadcast %cst_1 : f32 to vector<8x1024xf32>
    %5 = arith.maximumf %4, %3 : vector<8x1024xf32>
    %6 = vector.broadcast %cst_2 : f32 to vector<8x1024xf32>
    %7 = arith.minimumf %6, %5 : vector<8x1024xf32>
    %8 = arith.truncf %7 : vector<8x1024xf32> to vector<8x1024xbf16>
    %c0_3 = arith.constant 0 : index
    %c0_4 = arith.constant 0 : index
    %9 = vector.load %arg2[%c0_3, %c0_4] : memref<1024x32xbf16, #tpu.memory_space<vmem>>, vector<1024x32xbf16>
    %cst_5 = arith.constant dense<0.000000e+00> : vector<8x32xf32>
    %10 = tpu.matmul %8, %9, %cst_5 {dimension_numbers = #tpu.dot_dimension_numbers<[1], [0], [0], [1], [0, 0, 1, 1], [], []>} : vector<8x1024xbf16>, vector<1024x32xbf16>, vector<8x32xf32> -> vector<8x32xf32>
    %c0_6 = arith.constant 0 : index
    %c0_7 = arith.constant 0 : index
    %11 = vector.load %arg3[%c0_6, %c0_7] : memref<1x32xf32, #tpu.memory_space<vmem>>, vector<1x32xf32>
    %12 = vector.broadcast %11 : vector<1x32xf32> to vector<8x32xf32>
    %13 = arith.addf %10, %12 : vector<8x32xf32>
    %14 = arith.truncf %13 : vector<8x32xf32> to vector<8x32xbf16>
    %c0_8 = arith.constant 0 : index
    %c0_9 = arith.constant 0 : index
    %15 = vector.load %arg4[%c0_8, %c0_9] : memref<32x1024xbf16, #tpu.memory_space<vmem>>, vector<32x1024xbf16>
    %cst_10 = arith.constant dense<0.000000e+00> : vector<8x1024xf32>
    %16 = tpu.matmul %14, %15, %cst_10 {dimension_numbers = #tpu.dot_dimension_numbers<[1], [0], [0], [1], [0, 0, 1, 1], [], []>} : vector<8x32xbf16>, vector<32x1024xbf16>, vector<8x1024xf32> -> vector<8x1024xf32>
    %c0_11 = arith.constant 0 : index
    %c0_12 = arith.constant 0 : index
    %17 = vector.load %arg5[%c0_11, %c0_12] : memref<1x1024xf32, #tpu.memory_space<vmem>>, vector<1x1024xf32>
    %18 = vector.broadcast %17 : vector<1x1024xf32> to vector<8x1024xf32>
    %19 = arith.addf %16, %18 : vector<8x1024xf32>
    %20 = arith.truncf %19 : vector<8x1024xf32> to vector<8x1024xbf16>
    %c0_13 = arith.constant 0 : index
    %c0_14 = arith.constant 0 : index
    %21 = vector.load %arg6[%c0_13, %c0_14] : memref<8x1024xbf16, #tpu.memory_space<vmem>>, vector<8x1024xbf16>
    tpu.vector_store %arg6[%c0_13, %c0_14], %20 {strides = array<i32>} : memref<8x1024xbf16, #tpu.memory_space<vmem>>, vector<8x1024xbf16>,
    return
  }
  func.func @transform_0(%arg0: i32) -> (i32, i32) {
    %c0_i32 = arith.constant 0 : i32
    %c0_i32_0 = arith.constant 0 : i32
    return %arg0, %c0_i32 : i32, i32
  }
  func.func @transform_1(%arg0: i32) -> (i32, i32) {
    %c0_i32 = arith.constant 0 : i32
    %c0_i32_0 = arith.constant 0 : i32
    %c0_i32_1 = arith.constant 0 : i32
    return %c0_i32, %c0_i32_0 : i32, i32
  }
  func.func @transform_2(%arg0: i32) -> (i32, i32) {
    %c0_i32 = arith.constant 0 : i32
    %c0_i32_0 = arith.constant 0 : i32
    %c0_i32_1 = arith.constant 0 : i32
    return %c0_i32, %c0_i32_0 : i32, i32
  }
  func.func @transform_3(%arg0: i32) -> (i32, i32) {
    %c0_i32 = arith.constant 0 : i32
    %c0_i32_0 = arith.constant 0 : i32
    %c0_i32_1 = arith.constant 0 : i32
    return %c0_i32, %c0_i32_0 : i32, i32
  }
  func.func @transform_4(%arg0: i32) -> (i32, i32) {
    %c0_i32 = arith.constant 0 : i32
    %c0_i32_0 = arith.constant 0 : i32
    %c0_i32_1 = arith.constant 0 : i32
    return %c0_i32, %c0_i32_0 : i32, i32
  }
  func.func @transform_5(%arg0: i32) -> (i32, i32) {
    %c0_i32 = arith.constant 0 : i32
    %c0_i32_0 = arith.constant 0 : i32
    return %arg0, %c0_i32 : i32, i32
  }
}

</mosaic_0001>

<llo_original>
// kernel: base_ae_forward.1
$region0: #{base_ae_forward.1}
  #allocation0 [shape = 'u32[]', space=smem, size = 0x4, offset = 0x4, fixed_abs, tag = 'smem constant byte address 0x4 - core index']
  #allocation1 [shape = 'u32[72,128]{1,0:T(1,128)}', space=vmem, size = 0x9000, scoped, tag = 'internal scratch']
  %s0 = inlined_call_operand.vmem [shape: f32[2,1024], index: 0, kind: input, shape index: {}]
  %s1 = inlined_call_operand.vmem [shape: bf16[1024,32], index: 1, kind: input, shape index: {}]
  %s2 = inlined_call_operand.vmem [shape: f32[1,32], index: 2, kind: input, shape index: {}]
  %s3 = inlined_call_operand.vmem [shape: bf16[32,1024], index: 3, kind: input, shape index: {}]
  %s4 = inlined_call_operand.vmem [shape: f32[1,1024], index: 4, kind: input, shape index: {}]
  %s5 = inlined_call_operand.vmem [shape: bf16[2,1024], index: 5, kind: output, shape index: {}]
  %s6 = sld [smem:[#allocation0]]
  $region64: #{base_ae_forward.1} parent=0
    _
  %s8 = ssub.s32 1, %s6
  %s9 = scalar_select 0, %s8, %s6
  $region1: #{base_ae_forward.1} parent=0
    #allocation2 [shape = 'u8[16384]{0}', space=vmem, size = 0x4000, scoped, tag = 'output window, operand 0, single buffered']
    // Predicated region
    $region2: #{base_ae_forward.1} parent=1 // pred_check
      _
    $region3: #{base_ae_forward.1} parent=1 // pred_check_branch
      %11 = sbr.rel (0) target = $region5
    $region4: #{base_ae_forward.1} parent=1 // pred_region
      _
    $region5: #{base_ae_forward.1} parent=1 // pred_fallthru
      _
    // Predicated region
    $region6: #{base_ae_forward.1} parent=1 // pred_check
      _
    $region7: #{base_ae_forward.1} parent=1 // pred_check_branch
      %13 = sbr.rel (0) target = $region9
    $region8: #{base_ae_forward.1} parent=1 // pred_region
      _
    $region9: #{base_ae_forward.1} parent=1 // pred_fallthru
      _
    // Predicated region
    $region10: #{base_ae_forward.1} parent=1 // pred_check
      _
    $region11: #{base_ae_forward.1} parent=1 // pred_check_branch
      %15 = sbr.rel (0) target = $region13
    $region12: #{base_ae_forward.1} parent=1 // pred_region
      _
    $region13: #{base_ae_forward.1} parent=1 // pred_fallthru
      _
    // Predicated region
    $region14: #{base_ae_forward.1} parent=1 // pred_check
      _
    $region15: #{base_ae_forward.1} parent=1 // pred_check_branch
      %17 = sbr.rel (0) target = $region17
    $region16: #{base_ae_forward.1} parent=1 // pred_region
      _
    $region17: #{base_ae_forward.1} parent=1 // pred_fallthru
      _
    // Predicated region
    $region18: #{base_ae_forward.1} parent=1 // pred_check
      _
    $region19: #{base_ae_forward.1} parent=1 // pred_check_branch
      %19 = sbr.rel (0) target = $region21
    $region20: #{base_ae_forward.1} parent=1 // pred_region
      _
    $region21: #{base_ae_forward.1} parent=1 // pred_fallthru
      _
    %v21 = vld [vmem:[%s0] sm:$0xff]
    %v22 = vld [vmem:[%s0 + $0x8] sm:$0xff]
    %v23 = vld [vmem:[%s0 + $0x10] sm:$0xff]
    %v24 = vld [vmem:[%s0 + $0x18] sm:$0xff]
    %v25 = vld [vmem:[%s0 + $0x20] sm:$0xff]
    %v26 = vld [vmem:[%s0 + $0x28] sm:$0xff]
    %v27 = vld [vmem:[%s0 + $0x30] sm:$0xff]
    %v28 = vld [vmem:[%s0 + $0x38] sm:$0xff]
    %vm29 = vcmp.ne.f32.partialorder %v21, %v21
    %vm30 = vcmp.ne.f32.partialorder %v22, %v22
    %vm31 = vcmp.ne.f32.partialorder %v23, %v23
    %vm32 = vcmp.ne.f32.partialorder %v24, %v24
    %vm33 = vcmp.ne.f32.partialorder %v25, %v25
    %vm34 = vcmp.ne.f32.partialorder %v26, %v26
    %vm35 = vcmp.ne.f32.partialorder %v27, %v27
    %vm36 = vcmp.ne.f32.partialorder %v28, %v28
    %v37 = vsel %vm29, 0.0, %v21
    %v38 = vsel %vm30, 0.0, %v22
    %v39 = vsel %vm31, 0.0, %v23
    %v40 = vsel %vm32, 0.0, %v24
    %v41 = vsel %vm33, 0.0, %v25
    %v42 = vsel %vm34, 0.0, %v26
    %v43 = vsel %vm35, 0.0, %v27
    %v44 = vsel %vm36, 0.0, %v28
    %v45 = vmax.f32 %v37, -3.4028235e+38
    %v46 = vmax.f32 %v38, -3.4028235e+38
    %v47 = vmax.f32 %v39, -3.4028235e+38
    %v48 = vmax.f32 %v40, -3.4028235e+38
    %v49 = vmax.f32 %v41, -3.4028235e+38
    %v50 = vmax.f32 %v42, -3.4028235e+38
    %v51 = vmax.f32 %v43, -3.4028235e+38
    %v52 = vmax.f32 %v44, -3.4028235e+38
    %v53 = vmin.f32 %v45, 3.4028235e+38
    %v54 = vmin.f32 %v46, 3.4028235e+38
    %v55 = vmin.f32 %v47, 3.4028235e+38
    %v56 = vmin.f32 %v48, 3.4028235e+38
    %v57 = vmin.f32 %v49, 3.4028235e+38
    %v58 = vmin.f32 %v50, 3.4028235e+38
    %v59 = vmin.f32 %v51, 3.4028235e+38
    %v60 = vmin.f32 %v52, 3.4028235e+38
    %69 = vst [vmem:[#allocation1] ss:$4 sm:$0xff] %v53
    %s70 = scalar_lea.vmem [#allocation1], 1
    %71 = vst [vmem:[%s70] ss:$4 sm:$0xff] %v55
    %s72 = scalar_lea.vmem [#allocation1], 2
    %73 = vst [vmem:[%s72] ss:$4 sm:$0xff] %v57
    %s74 = scalar_lea.vmem [#allocation1], 3
    %75 = vst [vmem:[%s74] ss:$4 sm:$0xff] %v59
    %s76 = scalar_lea.vmem [#allocation1], 32
    %77 = vst [vmem:[%s76] ss:$4 sm:$0xff] %v54
    %s78 = scalar_lea.vmem [#allocation1], 33
    %79 = vst [vmem:[%s78] ss:$4 sm:$0xff] %v56
    %s80 = scalar_lea.vmem [#allocation1], 34
    %81 = vst [vmem:[%s80] ss:$4 sm:$0xff] %v58
    %s82 = scalar_lea.vmem [#allocation1], 35
    %83 = vst [vmem:[%s82] ss:$4 sm:$0xff] %v60
    %v84 = vld.sshfl [vmem:[#allocation1] sm:$0xff pattern:$0x73625140]
    %v85 = vld.sshfl [vmem:[#allocation1 + $0x8] sm:$0xff pattern:$0x73625140]
    %v86 = vld.sshfl [vmem:[#allocation1 + $0x10] sm:$0xff pattern:$0x73625140]
    %v87 = vld.sshfl [vmem:[#allocation1 + $0x18] sm:$0xff pattern:$0x73625140]
    %v88 = vld.sshfl [vmem:[#allocation1 + $0x20] sm:$0xff pattern:$0x73625140]
    %v89 = vld.sshfl [vmem:[#allocation1 + $0x28] sm:$0xff pattern:$0x73625140]
    %v90 = vld.sshfl [vmem:[#allocation1 + $0x30] sm:$0xff pattern:$0x73625140]
    %v91 = vld.sshfl [vmem:[#allocation1 + $0x38] sm:$0xff pattern:$0x73625140]
    %v100 = vpack.c.bf16 %v84, %v84
    %v101 = vpack.c.bf16 %v85, %v85
    %v102 = vpack.c.bf16 %v86, %v86
    %v103 = vpack.c.bf16 %v87, %v87
    %v104 = vpack.c.bf16 %v88, %v88
    %v105 = vpack.c.bf16 %v89, %v89
    %v106 = vpack.c.bf16 %v90, %v90
    %v107 = vpack.c.bf16 %v91, %v91
    %v108 = vld [vmem:[%s1] sm:$0xf]
    %v109 = vld [vmem:[%s1 + $0x4] sm:$0xf]
    %v110 = vld [vmem:[%s1 + $0x8] sm:$0xf]
    %v111 = vld [vmem:[%s1 + $0xc] sm:$0xf]
    %v112 = vld [vmem:[%s1 + $0x10] sm:$0xf]
    %v113 = vld [vmem:[%s1 + $0x14] sm:$0xf]
    %v114 = vld [vmem:[%s1 + $0x18] sm:$0xf]
    %v115 = vld [vmem:[%s1 + $0x1c] sm:$0xf]
    %v116 = vld [vmem:[%s1 + $0x20] sm:$0xf]
    %v117 = vld [vmem:[%s1 + $0x24] sm:$0xf]
    %v118 = vld [vmem:[%s1 + $0x28] sm:$0xf]
    %v119 = vld [vmem:[%s1 + $0x2c] sm:$0xf]
    %v120 = vld [vmem:[%s1 + $0x30] sm:$0xf]
    %v121 = vld [vmem:[%s1 + $0x34] sm:$0xf]
    %v122 = vld [vmem:[%s1 + $0x38] sm:$0xf]
    %v123 = vld [vmem:[%s1 + $0x3c] sm:$0xf]
    %v124 = vld [vmem:[%s1 + $0x40] sm:$0xf]
    %v125 = vld [vmem:[%s1 + $0x44] sm:$0xf]
    %v126 = vld [vmem:[%s1 + $0x48] sm:$0xf]
    %v127 = vld [vmem:[%s1 + $0x4c] sm:$0xf]
    %v128 = vld [vmem:[%s1 + $0x50] sm:$0xf]
    %v129 = vld [vmem:[%s1 + $0x54] sm:$0xf]
    %v130 = vld [vmem:[%s1 + $0x58] sm:$0xf]
    %v131 = vld [vmem:[%s1 + $0x5c] sm:$0xf]
    %v132 = vld [vmem:[%s1 + $0x60] sm:$0xf]
    %v133 = vld [vmem:[%s1 + $0x64] sm:$0xf]
    %v134 = vld [vmem:[%s1 + $0x68] sm:$0xf]
    %v135 = vld [vmem:[%s1 + $0x6c] sm:$0xf]
    %v136 = vld [vmem:[%s1 + $0x70] sm:$0xf]
    %v137 = vld [vmem:[%s1 + $0x74] sm:$0xf]
    %v138 = vld [vmem:[%s1 + $0x78] sm:$0xf]
    %v139 = vld [vmem:[%s1 + $0x7c] sm:$0xf]
    %v140 = vld [vmem:[%s1 + $0x80] sm:$0xf]
    %v141 = vld [vmem:[%s1 + $0x84] sm:$0xf]
    %v142 = vld [vmem:[%s1 + $0x88] sm:$0xf]
    %v143 = vld [vmem:[%s1 + $0x8c] sm:$0xf]
    %v144 = vld [vmem:[%s1 + $0x90] sm:$0xf]
    %v145 = vld [vmem:[%s1 + $0x94] sm:$0xf]
    %v146 = vld [vmem:[%s1 + $0x98] sm:$0xf]
    %v147 = vld [vmem:[%s1 + $0x9c] sm:$0xf]
    %v148 = vld [vmem:[%s1 + $0xa0] sm:$0xf]
    %v149 = vld [vmem:[%s1 + $0xa4] sm:$0xf]
    %v150 = vld [vmem:[%s1 + $0xa8] sm:$0xf]
    %v151 = vld [vmem:[%s1 + $0xac] sm:$0xf]
    %v152 = vld [vmem:[%s1 + $0xb0] sm:$0xf]
    %v153 = vld [vmem:[%s1 + $0xb4] sm:$0xf]
    %v154 = vld [vmem:[%s1 + $0xb8] sm:$0xf]
    %v155 = vld [vmem:[%s1 + $0xbc] sm:$0xf]
    %v156 = vld [vmem:[%s1 + $0xc0] sm:$0xf]
    %v157 = vld [vmem:[%s1 + $0xc4] sm:$0xf]
    %v158 = vld [vmem:[%s1 + $0xc8] sm:$0xf]
    %v159 = vld [vmem:[%s1 + $0xcc] sm:$0xf]
    %v160 = vld [vmem:[%s1 + $0xd0] sm:$0xf]
    %v161 = vld [vmem:[%s1 + $0xd4] sm:$0xf]
    %v162 = vld [vmem:[%s1 + $0xd8] sm:$0xf]
    %v163 = vld [vmem:[%s1 + $0xdc] sm:$0xf]
    %v164 = vld [vmem:[%s1 + $0xe0] sm:$0xf]
    %v165 = vld [vmem:[%s1 + $0xe4] sm:$0xf]
    %v166 = vld [vmem:[%s1 + $0xe8] sm:$0xf]
    %v167 = vld [vmem:[%s1 + $0xec] sm:$0xf]
    %v168 = vld [vmem:[%s1 + $0xf0] sm:$0xf]
    %v169 = vld [vmem:[%s1 + $0xf4] sm:$0xf]
    %v170 = vld [vmem:[%s1 + $0xf8] sm:$0xf]
    %v171 = vld [vmem:[%s1 + $0xfc] sm:$0xf]
    %v172 = vld [vmem:[%s1 + $0x100] sm:$0xf]
    %v173 = vld [vmem:[%s1 + $0x104] sm:$0xf]
    %v174 = vld [vmem:[%s1 + $0x108] sm:$0xf]
    %v175 = vld [vmem:[%s1 + $0x10c] sm:$0xf]
    %v176 = vld [vmem:[%s1 + $0x110] sm:$0xf]
    %v177 = vld [vmem:[%s1 + $0x114] sm:$0xf]
    %v178 = vld [vmem:[%s1 + $0x118] sm:$0xf]
    %v179 = vld [vmem:[%s1 + $0x11c] sm:$0xf]
    %v180 = vld [vmem:[%s1 + $0x120] sm:$0xf]
    %v181 = vld [vmem:[%s1 + $0x124] sm:$0xf]
    %v182 = vld [vmem:[%s1 + $0x128] sm:$0xf]
    %v183 = vld [vmem:[%s1 + $0x12c] sm:$0xf]
    %v184 = vld [vmem:[%s1 + $0x130] sm:$0xf]
    %v185 = vld [vmem:[%s1 + $0x134] sm:$0xf]
    %v186 = vld [vmem:[%s1 + $0x138] sm:$0xf]
    %v187 = vld [vmem:[%s1 + $0x13c] sm:$0xf]
    %v188 = vld [vmem:[%s1 + $0x140] sm:$0xf]
    %v189 = vld [vmem:[%s1 + $0x144] sm:$0xf]
    %v190 = vld [vmem:[%s1 + $0x148] sm:$0xf]
    %v191 = vld [vmem:[%s1 + $0x14c] sm:$0xf]
    %v192 = vld [vmem:[%s1 + $0x150] sm:$0xf]
    %v193 = vld [vmem:[%s1 + $0x154] sm:$0xf]
    %v194 = vld [vmem:[%s1 + $0x158] sm:$0xf]
    %v195 = vld [vmem:[%s1 + $0x15c] sm:$0xf]
    %v196 = vld [vmem:[%s1 + $0x160] sm:$0xf]
    %v197 = vld [vmem:[%s1 + $0x164] sm:$0xf]
    %v198 = vld [vmem:[%s1 + $0x168] sm:$0xf]
    %v199 = vld [vmem:[%s1 + $0x16c] sm:$0xf]
    %v200 = vld [vmem:[%s1 + $0x170] sm:$0xf]
    %v201 = vld [vmem:[%s1 + $0x174] sm:$0xf]
    %v202 = vld [vmem:[%s1 + $0x178] sm:$0xf]
    %v203 = vld [vmem:[%s1 + $0x17c] sm:$0xf]
    %v204 = vld [vmem:[%s1 + $0x180] sm:$0xf]
    %v205 = vld [vmem:[%s1 + $0x184] sm:$0xf]
    %v206 = vld [vmem:[%s1 + $0x188] sm:$0xf]
    %v207 = vld [vmem:[%s1 + $0x18c] sm:$0xf]
    %v208 = vld [vmem:[%s1 + $0x190] sm:$0xf]
    %v209 = vld [vmem:[%s1 + $0x194] sm:$0xf]
    %v210 = vld [vmem:[%s1 + $0x198] sm:$0xf]
    %v211 = vld [vmem:[%s1 + $0x19c] sm:$0xf]
    %v212 = vld [vmem:[%s1 + $0x1a0] sm:$0xf]
    %v213 = vld [vmem:[%s1 + $0x1a4] sm:$0xf]
    %v214 = vld [vmem:[%s1 + $0x1a8] sm:$0xf]
    %v215 = vld [vmem:[%s1 + $0x1ac] sm:$0xf]
    %v216 = vld [vmem:[%s1 + $0x1b0] sm:$0xf]
    %v217 = vld [vmem:[%s1 + $0x1b4] sm:$0xf]
    %v218 = vld [vmem:[%s1 + $0x1b8] sm:$0xf]
    %v219 = vld [vmem:[%s1 + $0x1bc] sm:$0xf]
    %v220 = vld [vmem:[%s1 + $0x1c0] sm:$0xf]
    %v221 = vld [vmem:[%s1 + $0x1c4] sm:$0xf]
    %v222 = vld [vmem:[%s1 + $0x1c8] sm:$0xf]
    %v223 = vld [vmem:[%s1 + $0x1cc] sm:$0xf]
    %v224 = vld [vmem:[%s1 + $0x1d0] sm:$0xf]
    %v225 = vld [vmem:[%s1 + $0x1d4] sm:$0xf]
    %v226 = vld [vmem:[%s1 + $0x1d8] sm:$0xf]
    %v227 = vld [vmem:[%s1 + $0x1dc] sm:$0xf]
    %v228 = vld [vmem:[%s1 + $0x1e0] sm:$0xf]
    %v229 = vld [vmem:[%s1 + $0x1e4] sm:$0xf]
    %v230 = vld [vmem:[%s1 + $0x1e8] sm:$0xf]
    %v231 = vld [vmem:[%s1 + $0x1ec] sm:$0xf]
    %v232 = vld [vmem:[%s1 + $0x1f0] sm:$0xf]
    %v233 = vld [vmem:[%s1 + $0x1f4] sm:$0xf]
    %v234 = vld [vmem:[%s1 + $0x1f8] sm:$0xf]
    %v235 = vld [vmem:[%s1 + $0x1fc] sm:$0xf]
    %v236 = vld [vmem:[%s2] sm:$0x1]
    %v238 = vperm.slane %v236, 0
    %v368 = vunpack.c.l.b16 %v108
    %v369 = vunpack.c.l.b16 %v109
    %v370 = vunpack.c.l.b16 %v110
    %v371 = vunpack.c.l.b16 %v111
    %v372 = vunpack.c.l.b16 %v112
    %v373 = vunpack.c.l.b16 %v113
    %v374 = vunpack.c.l.b16 %v114
    %v375 = vunpack.c.l.b16 %v115
    %v376 = vunpack.c.l.b16 %v116
    %v377 = vunpack.c.l.b16 %v117
    %v378 = vunpack.c.l.b16 %v118
    %v379 = vunpack.c.l.b16 %v119
    %v380 = vunpack.c.l.b16 %v120
    %v381 = vunpack.c.l.b16 %v121
    %v382 = vunpack.c.l.b16 %v122
    %v383 = vunpack.c.l.b16 %v123
    %v384 = vunpack.c.l.b16 %v124
    %v385 = vunpack.c.l.b16 %v125
    %v386 = vunpack.c.l.b16 %v126
    %v387 = vunpack.c.l.b16 %v127
    %v388 = vunpack.c.l.b16 %v128
    %v389 = vunpack.c.l.b16 %v129
    %v390 = vunpack.c.l.b16 %v130
    %v391 = vunpack.c.l.b16 %v131
    %v392 = vunpack.c.l.b16 %v132
    %v393 = vunpack.c.l.b16 %v133
    %v394 = vunpack.c.l.b16 %v134
    %v395 = vunpack.c.l.b16 %v135
    %v396 = vunpack.c.l.b16 %v136
    %v397 = vunpack.c.l.b16 %v137
    %v398 = vunpack.c.l.b16 %v138
    %v399 = vunpack.c.l.b16 %v139
    %v400 = vunpack.c.l.b16 %v140
    %v401 = vunpack.c.l.b16 %v141
    %v402 = vunpack.c.l.b16 %v142
    %v403 = vunpack.c.l.b16 %v143
    %v404 = vunpack.c.l.b16 %v144
    %v405 = vunpack.c.l.b16 %v145
    %v406 = vunpack.c.l.b16 %v146
    %v407 = vunpack.c.l.b16 %v147
    %v408 = vunpack.c.l.b16 %v148
    %v409 = vunpack.c.l.b16 %v149
    %v410 = vunpack.c.l.b16 %v150
    %v411 = vunpack.c.l.b16 %v151
    %v412 = vunpack.c.l.b16 %v152
    %v413 = vunpack.c.l.b16 %v153
    %v414 = vunpack.c.l.b16 %v154
    %v415 = vunpack.c.l.b16 %v155
    %v416 = vunpack.c.l.b16 %v156
    %v417 = vunpack.c.l.b16 %v157
    %v418 = vunpack.c.l.b16 %v158
    %v419 = vunpack.c.l.b16 %v159
    %v420 = vunpack.c.l.b16 %v160
    %v421 = vunpack.c.l.b16 %v161
    %v422 = vunpack.c.l.b16 %v162
    %v423 = vunpack.c.l.b16 %v163
    %v424 = vunpack.c.l.b16 %v164
    %v425 = vunpack.c.l.b16 %v165
    %v426 = vunpack.c.l.b16 %v166
    %v427 = vunpack.c.l.b16 %v167
    %v428 = vunpack.c.l.b16 %v168
    %v429 = vunpack.c.l.b16 %v169
    %v430 = vunpack.c.l.b16 %v170
    %v431 = vunpack.c.l.b16 %v171
    %v432 = vunpack.c.l.b16 %v172
    %v433 = vunpack.c.l.b16 %v173
    %v434 = vunpack.c.l.b16 %v174
    %v435 = vunpack.c.l.b16 %v175
    %v436 = vunpack.c.l.b16 %v176
    %v437 = vunpack.c.l.b16 %v177
    %v438 = vunpack.c.l.b16 %v178
    %v439 = vunpack.c.l.b16 %v179
    %v440 = vunpack.c.l.b16 %v180
    %v441 = vunpack.c.l.b16 %v181
    %v442 = vunpack.c.l.b16 %v182
    %v443 = vunpack.c.l.b16 %v183
    %v444 = vunpack.c.l.b16 %v184
    %v445 = vunpack.c.l.b16 %v185
    %v446 = vunpack.c.l.b16 %v186
    %v447 = vunpack.c.l.b16 %v187
    %v448 = vunpack.c.l.b16 %v188
    %v449 = vunpack.c.l.b16 %v189
    %v450 = vunpack.c.l.b16 %v190
    %v451 = vunpack.c.l.b16 %v191
    %v452 = vunpack.c.l.b16 %v192
    %v453 = vunpack.c.l.b16 %v193
    %v454 = vunpack.c.l.b16 %v194
    %v455 = vunpack.c.l.b16 %v195
    %v456 = vunpack.c.l.b16 %v196
    %v457 = vunpack.c.l.b16 %v197
    %v458 = vunpack.c.l.b16 %v198
    %v459 = vunpack.c.l.b16 %v199
    %v460 = vunpack.c.l.b16 %v200
    %v461 = vunpack.c.l.b16 %v201
    %v462 = vunpack.c.l.b16 %v202
    %v463 = vunpack.c.l.b16 %v203
    %v464 = vunpack.c.l.b16 %v204
    %v465 = vunpack.c.l.b16 %v205
    %v466 = vunpack.c.l.b16 %v206
    %v467 = vunpack.c.l.b16 %v207
    %v468 = vunpack.c.l.b16 %v208
    %v469 = vunpack.c.l.b16 %v209
    %v470 = vunpack.c.l.b16 %v210
    %v471 = vunpack.c.l.b16 %v211
    %v472 = vunpack.c.l.b16 %v212
    %v473 = vunpack.c.l.b16 %v213
    %v474 = vunpack.c.l.b16 %v214
    %v475 = vunpack.c.l.b16 %v215
    %v476 = vunpack.c.l.b16 %v216
    %v477 = vunpack.c.l.b16 %v217
    %v478 = vunpack.c.l.b16 %v218
    %v479 = vunpack.c.l.b16 %v219
    %v480 = vunpack.c.l.b16 %v220
    %v481 = vunpack.c.l.b16 %v221
    %v482 = vunpack.c.l.b16 %v222
    %v483 = vunpack.c.l.b16 %v223
    %v484 = vunpack.c.l.b16 %v224
    %v485 = vunpack.c.l.b16 %v225
    %v486 = vunpack.c.l.b16 %v226
    %v487 = vunpack.c.l.b16 %v227
    %v488 = vunpack.c.l.b16 %v228
    %v489 = vunpack.c.l.b16 %v229
    %v490 = vunpack.c.l.b16 %v230
    %v491 = vunpack.c.l.b16 %v231
    %v492 = vunpack.c.l.b16 %v232
    %v493 = vunpack.c.l.b16 %v233
    %v494 = vunpack.c.l.b16 %v234
    %v495 = vunpack.c.l.b16 %v235
    %v496 = vpack.c.b16 %v369, %v368
    %v497 = vpack.c.b16 %v371, %v370
    %v498 = vpack.c.b16 %v373, %v372
    %v499 = vpack.c.b16 %v375, %v374
    %v500 = vpack.c.b16 %v377, %v376
    %v501 = vpack.c.b16 %v379, %v378
    %v502 = vpack.c.b16 %v381, %v380
    %v503 = vpack.c.b16 %v383, %v382
    %v504 = vpack.c.b16 %v385, %v384
    %v505 = vpack.c.b16 %v387, %v386
    %v506 = vpack.c.b16 %v389, %v388
    %v507 = vpack.c.b16 %v391, %v390
    %v508 = vpack.c.b16 %v393, %v392
    %v509 = vpack.c.b16 %v395, %v394
    %v510 = vpack.c.b16 %v397, %v396
    %v511 = vpack.c.b16 %v399, %v398
    %v512 = vpack.c.b16 %v401, %v400
    %v513 = vpack.c.b16 %v403, %v402
    %v514 = vpack.c.b16 %v405, %v404
    %v515 = vpack.c.b16 %v407, %v406
    %v516 = vpack.c.b16 %v409, %v408
    %v517 = vpack.c.b16 %v411, %v410
    %v518 = vpack.c.b16 %v413, %v412
    %v519 = vpack.c.b16 %v415, %v414
    %v520 = vpack.c.b16 %v417, %v416
    %v521 = vpack.c.b16 %v419, %v418
    %v522 = vpack.c.b16 %v421, %v420
    %v523 = vpack.c.b16 %v423, %v422
    %v524 = vpack.c.b16 %v425, %v424
    %v525 = vpack.c.b16 %v427, %v426
    %v526 = vpack.c.b16 %v429, %v428
    %v527 = vpack.c.b16 %v431, %v430
    %v528 = vpack.c.b16 %v433, %v432
    %v529 = vpack.c.b16 %v435, %v434
    %v530 = vpack.c.b16 %v437, %v436
    %v531 = vpack.c.b16 %v439, %v438
    %v532 = vpack.c.b16 %v441, %v440
    %v533 = vpack.c.b16 %v443, %v442
    %v534 = vpack.c.b16 %v445, %v444
    %v535 = vpack.c.b16 %v447, %v446
    %v536 = vpack.c.b16 %v449, %v448
    %v537 = vpack.c.b16 %v451, %v450
    %v538 = vpack.c.b16 %v453, %v452
    %v539 = vpack.c.b16 %v455, %v454
    %v540 = vpack.c.b16 %v457, %v456
    %v541 = vpack.c.b16 %v459, %v458
    %v542 = vpack.c.b16 %v461, %v460
    %v543 = vpack.c.b16 %v463, %v462
    %v544 = vpack.c.b16 %v465, %v464
    %v545 = vpack.c.b16 %v467, %v466
    %v546 = vpack.c.b16 %v469, %v468
    %v547 = vpack.c.b16 %v471, %v470
    %v548 = vpack.c.b16 %v473, %v472
    %v549 = vpack.c.b16 %v475, %v474
    %v550 = vpack.c.b16 %v477, %v476
    %v551 = vpack.c.b16 %v479, %v478
    %v552 = vpack.c.b16 %v481, %v480
    %v553 = vpack.c.b16 %v483, %v482
    %v554 = vpack.c.b16 %v485, %v484
    %v555 = vpack.c.b16 %v487, %v486
    %v556 = vpack.c.b16 %v489, %v488
    %v557 = vpack.c.b16 %v491, %v490
    %v558 = vpack.c.b16 %v493, %v492
    %v559 = vpack.c.b16 %v495, %v494
    %624 = vmatpush.bf16.msra.mxu0 %v503
    %625 = vmatpush.bf16.msra.mxu0 %v502
    %626 = vmatpush.bf16.msra.mxu0 %v501
    %627 = vmatpush.bf16.msra.mxu0 %v500
    %628 = vmatpush.bf16.msra.mxu0 %v499
    %629 = vmatpush.bf16.msra.mxu0 %v498
    %630 = vmatpush.bf16.msra.mxu0 %v497
    %631 = vmatpush.bf16.msra.mxu0 %v496
    %632 = vmatmul.bf16.gmra.mxu0 %v100
    %v633 = vpop.f32.mrf.mxu0
    %v634 = vadd.f32 %v238, %v633
    %v635 = vpop.f32.mrf.mxu0
    %636 = vdwg.mxu0
    %637 = vmatpush.bf16.msra.mxu0 %v511
    %638 = vmatpush.bf16.msra.mxu0 %v510
    %639 = vmatpush.bf16.msra.mxu0 %v509
    %640 = vmatpush.bf16.msra.mxu0 %v508
    %641 = vmatpush.bf16.msra.mxu0 %v507
    %642 = vmatpush.bf16.msra.mxu0 %v506
    %643 = vmatpush.bf16.msra.mxu0 %v505
    %644 = vmatpush.bf16.msra.mxu0 %v504
    %645 = vmatmul.bf16.gmra.mxu0 %v101
    %v646 = vpop.f32.mrf.mxu0
    %v647 = vadd.f32 %v634, %v646
    %v648 = vpop.f32.mrf.mxu0
    %649 = vdwg.mxu0
    %650 = vmatpush.bf16.msra.mxu0 %v519
    %651 = vmatpush.bf16.msra.mxu0 %v518
    %652 = vmatpush.bf16.msra.mxu0 %v517
    %653 = vmatpush.bf16.msra.mxu0 %v516
    %654 = vmatpush.bf16.msra.mxu0 %v515
    %655 = vmatpush.bf16.msra.mxu0 %v514
    %656 = vmatpush.bf16.msra.mxu0 %v513
    %657 = vmatpush.bf16.msra.mxu0 %v512
    %658 = vmatmul.bf16.gmra.mxu0 %v102
    %v659 = vpop.f32.mrf.mxu0
    %v660 = vadd.f32 %v647, %v659
    %v661 = vpop.f32.mrf.mxu0
    %662 = vdwg.mxu0
    %663 = vmatpush.bf16.msra.mxu0 %v527
    %664 = vmatpush.bf16.msra.mxu0 %v526
    %665 = vmatpush.bf16.msra.mxu0 %v525
    %666 = vmatpush.bf16.msra.mxu0 %v524
    %667 = vmatpush.bf16.msra.mxu0 %v523
    %668 = vmatpush.bf16.msra.mxu0 %v522
    %669 = vmatpush.bf16.msra.mxu0 %v521
    %670 = vmatpush.bf16.msra.mxu0 %v520
    %671 = vmatmul.bf16.gmra.mxu0 %v103
    %v672 = vpop.f32.mrf.mxu0
    %v673 = vadd.f32 %v660, %v672
    %v674 = vpop.f32.mrf.mxu0
    %675 = vdwg.mxu0
    %676 = vmatpush.bf16.msra.mxu0 %v535
    %677 = vmatpush.bf16.msra.mxu0 %v534
    %678 = vmatpush.bf16.msra.mxu0 %v533
    %679 = vmatpush.bf16.msra.mxu0 %v532
    %680 = vmatpush.bf16.msra.mxu0 %v531
    %681 = vmatpush.bf16.msra.mxu0 %v530
    %682 = vmatpush.bf16.msra.mxu0 %v529
    %683 = vmatpush.bf16.msra.mxu0 %v528
    %684 = vmatmul.bf16.gmra.mxu0 %v104
    %v685 = vpop.f32.mrf.mxu0
    %v686 = vadd.f32 %v673, %v685
    %v687 = vpop.f32.mrf.mxu0
    %688 = vdwg.mxu0
    %689 = vmatpush.bf16.msra.mxu0 %v543
    %690 = vmatpush.bf16.msra.mxu0 %v542
    %691 = vmatpush.bf16.msra.mxu0 %v541
    %692 = vmatpush.bf16.msra.mxu0 %v540
    %693 = vmatpush.bf16.msra.mxu0 %v539
    %694 = vmatpush.bf16.msra.mxu0 %v538
    %695 = vmatpush.bf16.msra.mxu0 %v537
    %696 = vmatpush.bf16.msra.mxu0 %v536
    %697 = vmatmul.bf16.gmra.mxu0 %v105
    %v698 = vpop.f32.mrf.mxu0
    %v699 = vadd.f32 %v686, %v698
    %v700 = vpop.f32.mrf.mxu0
    %701 = vdwg.mxu0
    %702 = vmatpush.bf16.msra.mxu0 %v551
    %703 = vmatpush.bf16.msra.mxu0 %v550
    %704 = vmatpush.bf16.msra.mxu0 %v549
    %705 = vmatpush.bf16.msra.mxu0 %v548
    %706 = vmatpush.bf16.msra.mxu0 %v547
    %707 = vmatpush.bf16.msra.mxu0 %v546
    %708 = vmatpush.bf16.msra.mxu0 %v545
    %709 = vmatpush.bf16.msra.mxu0 %v544
    %710 = vmatmul.bf16.gmra.mxu0 %v106
    %v711 = vpop.f32.mrf.mxu0
    %v712 = vadd.f32 %v699, %v711
    %v713 = vpop.f32.mrf.mxu0
    %714 = vdwg.mxu0
    %715 = vmatpush.bf16.msra.mxu0 %v559
    %716 = vmatpush.bf16.msra.mxu0 %v558
    %717 = vmatpush.bf16.msra.mxu0 %v557
    %718 = vmatpush.bf16.msra.mxu0 %v556
    %719 = vmatpush.bf16.msra.mxu0 %v555
    %720 = vmatpush.bf16.msra.mxu0 %v554
    %721 = vmatpush.bf16.msra.mxu0 %v553
    %722 = vmatpush.bf16.msra.mxu0 %v552
    %723 = vmatmul.bf16.gmra.mxu0 %v107
    %v724 = vpop.f32.mrf.mxu0
    %v725 = vadd.f32 %v712, %v724
    %v726 = vpop.f32.mrf.mxu0
    %727 = vdwg.mxu0
    %v728 = vpack.c.bf16 %v725, %v725
    %v729 = vld [vmem:[%s3] sm:$0xff]
    %v730 = vld [vmem:[%s3 + $0x8] sm:$0xff]
    %v731 = vld [vmem:[%s3 + $0x10] sm:$0xff]
    %v732 = vld [vmem:[%s3 + $0x18] sm:$0xff]
    %v733 = vld [vmem:[%s3 + $0x20] sm:$0xff]
    %v734 = vld [vmem:[%s3 + $0x28] sm:$0xff]
    %v735 = vld [vmem:[%s3 + $0x30] sm:$0xff]
    %v736 = vld [vmem:[%s3 + $0x38] sm:$0xff]
    %v737 = vld [vmem:[%s3 + $0x40] sm:$0xff]
    %v738 = vld [vmem:[%s3 + $0x48] sm:$0xff]
    %v739 = vld [vmem:[%s3 + $0x50] sm:$0xff]
    %v740 = vld [vmem:[%s3 + $0x58] sm:$0xff]
    %v741 = vld [vmem:[%s3 + $0x60] sm:$0xff]
    %v742 = vld [vmem:[%s3 + $0x68] sm:$0xff]
    %v743 = vld [vmem:[%s3 + $0x70] sm:$0xff]
    %v744 = vld [vmem:[%s3 + $0x78] sm:$0xff]
    %v745 = vld [vmem:[%s4] sm:$0xff]
    %v747 = vperm.slane %v745, 0
    %v748 = vperm.slane %v745, 1
    %v749 = vperm.slane %v745, 2
    %v750 = vperm.slane %v745, 3
    %v751 = vperm.slane %v745, 4
    %v752 = vperm.slane %v745, 5
    %v753 = vperm.slane %v745, 6
    %v754 = vperm.slane %v745, 7
    %v779 = vunpack.c.l.b16 %v729
    %v780 = vunpack.c.h.b16 %v729
    %v781 = vunpack.c.l.b16 %v730
    %v782 = vunpack.c.h.b16 %v730
    %v783 = vunpack.c.l.b16 %v731
    %v784 = vunpack.c.h.b16 %v731
    %v785 = vunpack.c.l.b16 %v732
    %v786 = vunpack.c.h.b16 %v732
    %v787 = vunpack.c.l.b16 %v733
    %v788 = vunpack.c.h.b16 %v733
    %v789 = vunpack.c.l.b16 %v734
    %v790 = vunpack.c.h.b16 %v734
    %v791 = vunpack.c.l.b16 %v735
    %v792 = vunpack.c.h.b16 %v735
    %v793 = vunpack.c.l.b16 %v736
    %v794 = vunpack.c.h.b16 %v736
    %v795 = vunpack.c.l.b16 %v737
    %v796 = vunpack.c.h.b16 %v737
    %v797 = vunpack.c.l.b16 %v738
    %v798 = vunpack.c.h.b16 %v738
    %v799 = vunpack.c.l.b16 %v739
    %v800 = vunpack.c.h.b16 %v739
    %v801 = vunpack.c.l.b16 %v740
    %v802 = vunpack.c.h.b16 %v740
    %v803 = vunpack.c.l.b16 %v741
    %v804 = vunpack.c.h.b16 %v741
    %v805 = vunpack.c.l.b16 %v742
    %v806 = vunpack.c.h.b16 %v742
    %v807 = vunpack.c.l.b16 %v743
    %v808 = vunpack.c.h.b16 %v743
    %v809 = vunpack.c.l.b16 %v744
    %v810 = vunpack.c.h.b16 %v744
    %v811 = vpack.c.b16 %v787, %v779
    %v812 = vpack.c.b16 %v788, %v780
    %v813 = vpack.c.b16 %v789, %v781
    %v814 = vpack.c.b16 %v790, %v782
    %v815 = vpack.c.b16 %v791, %v783
    %v816 = vpack.c.b16 %v792, %v784
    %v817 = vpack.c.b16 %v793, %v785
    %v818 = vpack.c.b16 %v794, %v786
    %v819 = vpack.c.b16 %v803, %v795
    %v820 = vpack.c.b16 %v804, %v796
    %v821 = vpack.c.b16 %v805, %v797
    %v822 = vpack.c.b16 %v806, %v798
    %v823 = vpack.c.b16 %v807, %v799
    %v824 = vpack.c.b16 %v808, %v800
    %v825 = vpack.c.b16 %v809, %v801
    %v826 = vpack.c.b16 %v810, %v802
    %vm843 = vcmask 261120
    %v845 = vsel %vm843, %v728, 0
    %847 = vmatpush.bf16.msra.mxu0 0
    %848 = vmatpush.bf16.msra.mxu0 0
    %849 = vmatpush.bf16.msra.mxu0 0
    %850 = vmatpush.bf16.msra.mxu0 0
    %851 = vmatpush.bf16.msra.mxu0 0
    %852 = vmatpush.bf16.msra.mxu0 0
    %853 = vmatpush.bf16.msra.mxu0 %v819
    %854 = vmatpush.bf16.msra.mxu0 %v811
    %855 = vmatmul.bf16.gmra.mxu0 %v845
    %v856 = vpop.f32.mrf.mxu0
    %v857 = vadd.f32 %v747, %v856
    %v858 = vpop.f32.mrf.mxu0
    %859 = vdwg.mxu0
    %860 = vmatpush.bf16.msra.mxu0 0
    %861 = vmatpush.bf16.msra.mxu0 0
    %862 = vmatpush.bf16.msra.mxu0 0
    %863 = vmatpush.bf16.msra.mxu0 0
    %864 = vmatpush.bf16.msra.mxu0 0
    %865 = vmatpush.bf16.msra.mxu0 0
    %866 = vmatpush.bf16.msra.mxu0 %v820
    %867 = vmatpush.bf16.msra.mxu0 %v812
    %868 = vmatmul.bf16.gmra.mxu0 %v845
    %v869 = vpop.f32.mrf.mxu0
    %v870 = vadd.f32 %v748, %v869
    %v871 = vpop.f32.mrf.mxu0
    %872 = vdwg.mxu0
    %873 = vmatpush.bf16.msra.mxu0 0
    %874 = vmatpush.bf16.msra.mxu0 0
    %875 = vmatpush.bf16.msra.mxu0 0
    %876 = vmatpush.bf16.msra.mxu0 0
    %877 = vmatpush.bf16.msra.mxu0 0
    %878 = vmatpush.bf16.msra.mxu0 0
    %879 = vmatpush.bf16.msra.mxu0 %v821
    %880 = vmatpush.bf16.msra.mxu0 %v813
    %881 = vmatmul.bf16.gmra.mxu0 %v845
    %v882 = vpop.f32.mrf.mxu0
    %v883 = vadd.f32 %v749, %v882
    %v884 = vpop.f32.mrf.mxu0
    %885 = vdwg.mxu0
    %886 = vmatpush.bf16.msra.mxu0 0
    %887 = vmatpush.bf16.msra.mxu0 0
    %888 = vmatpush.bf16.msra.mxu0 0
    %889 = vmatpush.bf16.msra.mxu0 0
    %890 = vmatpush.bf16.msra.mxu0 0
    %891 = vmatpush.bf16.msra.mxu0 0
    %892 = vmatpush.bf16.msra.mxu0 %v822
    %893 = vmatpush.bf16.msra.mxu0 %v814
    %894 = vmatmul.bf16.gmra.mxu0 %v845
    %v895 = vpop.f32.mrf.mxu0
    %v896 = vadd.f32 %v750, %v895
    %v897 = vpop.f32.mrf.mxu0
    %898 = vdwg.mxu0
    %899 = vmatpush.bf16.msra.mxu0 0
    %900 = vmatpush.bf16.msra.mxu0 0
    %901 = vmatpush.bf16.msra.mxu0 0
    %902 = vmatpush.bf16.msra.mxu0 0
    %903 = vmatpush.bf16.msra.mxu0 0
    %904 = vmatpush.bf16.msra.mxu0 0
    %905 = vmatpush.bf16.msra.mxu0 %v823
    %906 = vmatpush.bf16.msra.mxu0 %v815
    %907 = vmatmul.bf16.gmra.mxu0 %v845
    %v908 = vpop.f32.mrf.mxu0
    %v909 = vadd.f32 %v751, %v908
    %v910 = vpop.f32.mrf.mxu0
    %911 = vdwg.mxu0
    %912 = vmatpush.bf16.msra.mxu0 0
    %913 = vmatpush.bf16.msra.mxu0 0
    %914 = vmatpush.bf16.msra.mxu0 0
    %915 = vmatpush.bf16.msra.mxu0 0
    %916 = vmatpush.bf16.msra.mxu0 0
    %917 = vmatpush.bf16.msra.mxu0 0
    %918 = vmatpush.bf16.msra.mxu0 %v824
    %919 = vmatpush.bf16.msra.mxu0 %v816
    %920 = vmatmul.bf16.gmra.mxu0 %v845
    %v921 = vpop.f32.mrf.mxu0
    %v922 = vadd.f32 %v752, %v921
    %v923 = vpop.f32.mrf.mxu0
    %924 = vdwg.mxu0
    %925 = vmatpush.bf16.msra.mxu0 0
    %926 = vmatpush.bf16.msra.mxu0 0
    %927 = vmatpush.bf16.msra.mxu0 0
    %928 = vmatpush.bf16.msra.mxu0 0
    %929 = vmatpush.bf16.msra.mxu0 0
    %930 = vmatpush.bf16.msra.mxu0 0
    %931 = vmatpush.bf16.msra.mxu0 %v825
    %932 = vmatpush.bf16.msra.mxu0 %v817
    %933 = vmatmul.bf16.gmra.mxu0 %v845
    %v934 = vpop.f32.mrf.mxu0
    %v935 = vadd.f32 %v753, %v934
    %v936 = vpop.f32.mrf.mxu0
    %937 = vdwg.mxu0
    %938 = vmatpush.bf16.msra.mxu0 0
    %939 = vmatpush.bf16.msra.mxu0 0
    %940 = vmatpush.bf16.msra.mxu0 0
    %941 = vmatpush.bf16.msra.mxu0 0
    %942 = vmatpush.bf16.msra.mxu0 0
    %943 = vmatpush.bf16.msra.mxu0 0
    %944 = vmatpush.bf16.msra.mxu0 %v826
    %945 = vmatpush.bf16.msra.mxu0 %v818
    %946 = vmatmul.bf16.gmra.mxu0 %v845
    %v947 = vpop.f32.mrf.mxu0
    %v948 = vadd.f32 %v754, %v947
    %v949 = vpop.f32.mrf.mxu0
    %950 = vdwg.mxu0
    %v951 = vpack.c.bf16 %v870, %v857
    %v952 = vpack.c.bf16 %v896, %v883
    %v953 = vpack.c.bf16 %v922, %v909
    %v954 = vpack.c.bf16 %v948, %v935
    %v959 = vrot.slane %v951, 3
    %v960 = vrot.slane %v952, 6
    %v961 = vrot.slane %v952, 1
    %v962 = vrot.slane %v953, 4
    %v963 = vrot.slane %v953, 7
    %v964 = vrot.slane %v954, 2
    %v965 = vrot.slane %v954, 5
    %vm966 = vcmask 1040384
    %v969 = vsel %vm966, %v951, %v959
    %vm970 = vcmask 1042434
    %v973 = vsel %vm970, %v960, %v961
    %vm974 = vcmask 1041408
    %v975 = vsel %vm974, %v969, %v973
    %vm976 = vcmask 1044484
    %v979 = vsel %vm976, %v962, %v963
    %vm980 = vcmask 1046534
    %v983 = vsel %vm980, %v964, %v965
    %vm984 = vcmask 1045508
    %v985 = vsel %vm984, %v979, %v983
    %vm986 = vcmask 1043456
    %v987 = vsel %vm986, %v975, %v985
    %vm988 = vcmask 1041409
    %v989 = vsel %vm988, %v951, %v959
    %vm990 = vcmask 1043459
    %v991 = vsel %vm990, %v960, %v961
    %vm992 = vcmask 1042433
    %v993 = vsel %vm992, %v989, %v991
    %vm994 = vcmask 1045509
    %v995 = vsel %vm994, %v962, %v963
    %vm996 = vcmask 1046528
    %v997 = vsel %vm996, %v965, %v964
    %vm998 = vcmask 1046533
    %v999 = vsel %vm998, %v995, %v997
    %vm1000 = vcmask 1044481
    %v1001 = vsel %vm1000, %v993, %v999
    %v1003 = vrot.slane %v1001, 1
    %v1004 = vsel %vm970, %v951, %v959
    %v1005 = vsel %vm976, %v960, %v961
    %vm1006 = vcmask 1043458
    %v1007 = vsel %vm1006, %v1004, %v1005
    %v1008 = vsel %vm980, %v962, %v963
    %v1009 = vsel %vm966, %v964, %v965
    %vm1010 = vcmask 1045504
    %v1011 = vsel %vm1010, %v1009, %v1008
    %vm1012 = vcmask 1045506
    %v1013 = vsel %vm1012, %v1007, %v1011
    %v1015 = vrot.slane %v1013, 2
    %v1016 = vsel %vm990, %v951, %v959
    %v1017 = vsel %vm994, %v960, %v961
    %vm1018 = vcmask 1044483
    %v1019 = vsel %vm1018, %v1016, %v1017
    %v1020 = vsel %vm996, %v963, %v962
    %v1021 = vsel %vm988, %v964, %v965
    %vm1022 = vcmask 1046529
    %v1023 = vsel %vm1022, %v1021, %v1020
    %vm1024 = vcmask 1046531
    %v1025 = vsel %vm1024, %v1019, %v1023
    %v1027 = vrot.slane %v1025, 3
    %1032 = vst [vmem:[#allocation2] sm:$0xff] %v987
    %1033 = vst [vmem:[#allocation2 + $0x8] sm:$0xff] %v1003
    %1034 = vst [vmem:[#allocation2 + $0x10] sm:$0xff] %v1015
    %1035 = vst [vmem:[#allocation2 + $0x18] sm:$0xff] %v1027
    // Predicated region
    $region22: #{base_ae_forward.1} parent=1 // pred_check
      _
    $region23: #{base_ae_forward.1} parent=1 // pred_check_branch
      %1037 = sbr.rel (0) target = $region25
    $region24: #{base_ae_forward.1} parent=1 // pred_region
      // Predicated region
      $region26: #{base_ae_forward.1} parent=24 // pred_check
        _
      $region27: #{base_ae_forward.1} parent=24 // pred_check_branch
        %1039 = sbr.rel (0) target = $region29
      $region28: #{base_ae_forward.1} parent=24 // pred_region
        // Predicated region
        $region30: #{base_ae_forward.1} parent=28 // pred_check
          _
        $region31: #{base_ae_forward.1} parent=28 // pred_check_branch
          %1041 = sbr.rel (0) target = $region33
        $region32: #{base_ae_forward.1} parent=28 // pred_region
          // Predicated region
          $region45: #{base_ae_forward.1} parent=32 // pred_check
            _
          $region46: #{base_ae_forward.1} parent=32 // pred_check_branch
            %1057 = sbr.rel (0) target = $region48
          $region47: #{base_ae_forward.1} parent=32 // pred_region
            loop: start=0, step=1, limit=1
            $region49: #{base_ae_forward.1} parent=47 // loop_pre_header
              _
            $region50: #{base_ae_forward.1} parent=47 // loop_header
              %s1059 = sphi 0, %s1063
              %p1060 = scmp.ge.s32.totalorder %s1059, 1
              %s1064 = sphi [#allocation2], [#allocation2]
              %s1065 = sphi %s5, %s5
            $region51: #{base_ae_forward.1} parent=47 // loop_header_branch
              %1062 = sbr.rel (%p1060) target = $region55
            $region52: #{base_ae_forward.1} parent=47 // loop_body
              %v1066 = vld [vmem:[%s1064] sm:$0xff]
              %1067 = vst [vmem:[%s1065] sm:$0xff] %v1066
            $region53: #{base_ae_forward.1} parent=47 // loop_footer
              %s1063 = sadd.s32 1, %s1059
            $region54: #{base_ae_forward.1} parent=47 // loop_footer_branch
              %1058 = sbr.rel target = $region50
            $region55: #{base_ae_forward.1} parent=47 // loop_exit
              _
          $region48: #{base_ae_forward.1} parent=32 // pred_fallthru
            _
          // Predicated region
          $region56: #{base_ae_forward.1} parent=32 // pred_check
            _
          $region57: #{base_ae_forward.1} parent=32 // pred_check_branch
            %1069 = sbr.rel target = $region59
          $region58: #{base_ae_forward.1} parent=32 // pred_region
            _
          $region59: #{base_ae_forward.1} parent=32 // pred_fallthru
            _
        $region33: #{base_ae_forward.1} parent=28 // pred_fallthru
          _
        // Predicated region
        $region34: #{base_ae_forward.1} parent=28 // pred_check
          _
        $region35: #{base_ae_forward.1} parent=28 // pred_check_branch
          %1043 = sbr.rel target = $region37
        $region36: #{base_ae_forward.1} parent=28 // pred_region
          %s1045 = ssub.s32 256, 1
          loop: start=0, step=1, limit=1
          $region38: #{base_ae_forward.1} parent=36 // loop_pre_header
            _
          $region39: #{base_ae_forward.1} parent=36 // loop_header
            %s1047 = sphi 0, %s1051
            %p1048 = scmp.ge.s32.totalorder %s1047, 1
            %s1052 = sphi [#allocation2], [#allocation2]
            %s1053 = sphi %s5, %s5
          $region40: #{base_ae_forward.1} parent=36 // loop_header_branch
            %1050 = sbr.rel (%p1048) target = $region44
          $region41: #{base_ae_forward.1} parent=36 // loop_body
            %v1054 = vld [vmem:[%s1052] sm:%s1045]
            %1055 = vst [vmem:[%s1053] sm:%s1045] %v1054
          $region42: #{base_ae_forward.1} parent=36 // loop_footer
            %s1051 = sadd.s32 1, %s1047
          $region43: #{base_ae_forward.1} parent=36 // loop_footer_branch
            %1046 = sbr.rel target = $region39
          $region44: #{base_ae_forward.1} parent=36 // loop_exit
            _
        $region37: #{base_ae_forward.1} parent=28 // pred_fallthru
          _
      $region29: #{base_ae_forward.1} parent=24 // pred_fallthru
        _
      %1070 = vnop
    $region25: #{base_ae_forward.1} parent=1 // pred_fallthru
      _
    // Predicated region
    $region60: #{base_ae_forward.1} parent=1 // pred_check
      _
    $region61: #{base_ae_forward.1} parent=1 // pred_check_branch
      %1072 = sbr.rel (0) target = $region63
    $region62: #{base_ae_forward.1} parent=1 // pred_region
      _
    $region63: #{base_ae_forward.1} parent=1 // pred_fallthru
      _

</llo_original>
